<compile_context>
chip_gen: v5e
topology: v5e:2x2
jax: 0.10.0
libtpu: 0.0.40
codegen_flags: <defaults>
</compile_context>

<pallas_src>
import functools

import jax
import jax.numpy as jnp
from jax.experimental import pallas as pl
from jax.experimental.pallas import tpu as pltpu

F = 8           # feature width of every layer in the module
N_LAYERS = 5
MAX_TB = 2048   # batch tile cap (lane axis); tiny VMEM footprint at F=8


def _net_kernel(add_skip, x_ref, w_ref, b_ref, o_ref):
    """One batch tile of the fused 5-layer MLP.

    x_ref : (F, TB)        activations, batch on lanes
    w_ref : (5, F, F)      PyTorch-layout weights (out, in), VMEM-resident
    b_ref : (F, 5)         column i = bias of layer i, VMEM-resident
    o_ref : (F, TB)        output tile
    """
    x = x_ref[...]  # (F, TB) f32

    def linear(i, v):
        # y = W_i @ v + b_i   (W_i is (out, in); bias broadcasts over lanes)
        w = w_ref[i]                  # (F, F) static slice
        b = b_ref[:, i:i + 1]         # (F, 1) static slice
        return jnp.dot(w, v, preferred_element_type=jnp.float32) + b

    # x1 = fc1(x)  (skip branch, from the ORIGINAL input)
    x1 = linear(0, x)

    # x = relu1(x)  -- relu of the original x, as written in the module
    h = jnp.maximum(x, 0.0)

    # fc2 -> relu2 ; fc3 -> relu3
    h = jnp.maximum(linear(1, h), 0.0)
    h = jnp.maximum(linear(2, h), 0.0)

    if add_skip:  # static Python bool, resolved at trace time
        h = h + x1

    # fc4 -> relu4 ; fc5 (no activation)
    h = jnp.maximum(linear(3, h), 0.0)
    out = linear(4, h)

    o_ref[...] = out.astype(o_ref.dtype)


def net_forward(x, params, a):
    """x: (B, 8) float32; params: 5 (W, b) pairs, W stored PyTorch-style
    as (out, in); a: static Python bool (mirrors `if a == True:`)."""
    B, feat = x.shape
    assert feat == F
    add_skip = bool(a == True)  # same gate as the PyTorch module  # noqa: E712

    # Pack parameters: one (5, F, F) weight tensor, one (F, 5) bias tensor.
    w_packed = jnp.stack([jnp.asarray(w, jnp.float32) for w, _ in params])          # (5, F, F)
    b_packed = jnp.stack([jnp.asarray(b, jnp.float32) for _, b in params], axis=1)  # (F, 5)

    # Transposed layout: batch on the lane axis.
    xt = jnp.asarray(x, jnp.float32).T  # (F, B)

    # Lane-aligned batch tile; pad B up to a multiple of it.
    tb = min(MAX_TB, pl.cdiv(B, 128) * 128)
    b_pad = pl.cdiv(B, tb) * tb
    if b_pad != B:
        xt = jnp.pad(xt, ((0, 0), (0, b_pad - B)))
    grid = (b_pad // tb,)

    kernel = functools.partial(_net_kernel, add_skip)

    out_t = pl.pallas_call(
        kernel,
        out_shape=jax.ShapeDtypeStruct((F, b_pad), jnp.float32),
        grid=grid,
        in_specs=[
            pl.BlockSpec((F, tb), lambda i: (0, i)),              # activations: tiled over batch
            pl.BlockSpec((N_LAYERS, F, F), lambda i: (0, 0, 0)),  # weights: resident
            pl.BlockSpec((F, N_LAYERS), lambda i: (0, 0)),        # biases:  resident
        ],
        out_specs=pl.BlockSpec((F, tb), lambda i: (0, i)),
        compiler_params=pltpu.CompilerParams(
            dimension_semantics=("parallel",)),
    )(xt, w_packed, b_packed)

    return out_t[:, :B].T  # back to (B, F)


def _reference_forward(x, params, a):
    """Pure-JAX reference mirroring the PyTorch module."""
    def lin(v, w, b):
        return v @ w.T + b
    (w1, b1), (w2, b2), (w3, b3), (w4, b4), (w5, b5) = params
    x1 = lin(x, w1, b1)
    h = jnp.maximum(x, 0.0)
    h = jnp.maximum(lin(h, w2, b2), 0.0)
    h = jnp.maximum(lin(h, w3, b3), 0.0)
    if a == True:  # noqa: E712  (same quirk as the module)
        h = h + x1
    h = jnp.maximum(lin(h, w4, b4), 0.0)
    return lin(h, w5, b5)


def init_params(key):
    """PyTorch-default-style init: U(-1/sqrt(in), 1/sqrt(in))."""
    params = []
    bound = 1.0 / jnp.sqrt(float(F))
    for _ in range(N_LAYERS):
        kw, kb, key = jax.random.split(key, 3)
        w = jax.random.uniform(kw, (F, F), jnp.float32, -bound, bound)  # (out, in)
        b = jax.random.uniform(kb, (F,), jnp.float32, -bound, bound)
        params.append((w, b))
    return params


if __name__ == "__main__":
    key = jax.random.PRNGKey(0)
    kx, kp = jax.random.split(key)

    B = 8  # small batch, consistent with the module's 8-wide layers
    x = jax.random.normal(kx, (B, F), jnp.float32)
    params = init_params(kp)

    for a in (True, False):
        out = net_forward(x, params, a)
        out = jax.block_until_ready(out)
        ref = _reference_forward(x, params, a)
        assert out.shape == (B, F)
        assert jnp.allclose(out, ref, atol=1e-5, rtol=1e-5), "mismatch vs reference"

    print("KERNEL_OK")
</pallas_src>

<mosaic_0001>
module attributes {stable_mosaic.version = 11 : i64} {
  func.func @_net_kernel(%arg0: i32, %arg1: memref<8x128xf32, #tpu.memory_space<vmem>>, %arg2: memref<5x8x8xf32, #tpu.memory_space<vmem>>, %arg3: memref<8x5xf32, #tpu.memory_space<vmem>>, %arg4: memref<8x128xf32, #tpu.memory_space<vmem>>) attributes {dimension_semantics = [#tpu.dimension_semantics<parallel>], iteration_bounds = array<i64: 1>, scalar_prefetch = 0 : i64, scratch_operands = 0 : i64, tpu.core_type = #tpu.core_type<tc>, window_params = [{transform_indices = @transform_0, window_bounds = array<i64: 8, 128>}, {pipeline_mode = #tpu.pipeline_mode<synchronous>, transform_indices = @transform_1, window_bounds = array<i64: 5, 8, 8>}, {pipeline_mode = #tpu.pipeline_mode<synchronous>, transform_indices = @transform_2, window_bounds = array<i64: 8, 5>}, {transform_indices = @transform_3, window_bounds = array<i64: 8, 128>}]} {
    %c0 = arith.constant 0 : index
    %c0_0 = arith.constant 0 : index
    %0 = vector.load %arg1[%c0, %c0_0] : memref<8x128xf32, #tpu.memory_space<vmem>>, vector<8x128xf32>
    %c0_1 = arith.constant 0 : index
    %c0_2 = arith.constant 0 : index
    %c0_3 = arith.constant 0 : index
    %1 = vector.load %arg2[%c0_1, %c0_2, %c0_3] : memref<5x8x8xf32, #tpu.memory_space<vmem>>, vector<1x8x8xf32>
    %2 = vector.shape_cast %1 : vector<1x8x8xf32> to vector<8x8xf32>
    %c0_4 = arith.constant 0 : index
    %c0_5 = arith.constant 0 : index
    %3 = vector.load %arg3[%c0_4, %c0_5] : memref<8x5xf32, #tpu.memory_space<vmem>>, vector<8x1xf32>
    %cst = arith.constant dense<0.000000e+00> : vector<8x128xf32>
    %4 = tpu.matmul %2, %0, %cst {dimension_numbers = #tpu.dot_dimension_numbers<[1], [0], [0], [1], [0, 0, 1, 1], [], []>} : vector<8x8xf32>, vector<8x128xf32>, vector<8x128xf32> -> vector<8x128xf32>
    %5 = vector.broadcast %3 : vector<8x1xf32> to vector<8x128xf32>
    %6 = arith.addf %4, %5 : vector<8x128xf32>
    %cst_6 = arith.constant 0.000000e+00 : f32
    %7 = vector.broadcast %cst_6 : f32 to vector<8x128xf32>
    %8 = arith.maximumf %0, %7 : vector<8x128xf32>
    %c1 = arith.constant 1 : index
    %c0_7 = arith.constant 0 : index
    %c0_8 = arith.constant 0 : index
    %9 = vector.load %arg2[%c1, %c0_7, %c0_8] : memref<5x8x8xf32, #tpu.memory_space<vmem>>, vector<1x8x8xf32>
    %10 = vector.shape_cast %9 : vector<1x8x8xf32> to vector<8x8xf32>
    %c0_9 = arith.constant 0 : index
    %c1_10 = arith.constant 1 : index
    %11 = vector.load %arg3[%c0_9, %c1_10] : memref<8x5xf32, #tpu.memory_space<vmem>>, vector<8x1xf32>
    %cst_11 = arith.constant dense<0.000000e+00> : vector<8x128xf32>
    %12 = tpu.matmul %10, %8, %cst_11 {dimension_numbers = #tpu.dot_dimension_numbers<[1], [0], [0], [1], [0, 0, 1, 1], [], []>} : vector<8x8xf32>, vector<8x128xf32>, vector<8x128xf32> -> vector<8x128xf32>
    %13 = vector.broadcast %11 : vector<8x1xf32> to vector<8x128xf32>
    %14 = arith.addf %12, %13 : vector<8x128xf32>
    %cst_12 = arith.constant 0.000000e+00 : f32
    %15 = vector.broadcast %cst_12 : f32 to vector<8x128xf32>
    %16 = arith.maximumf %14, %15 : vector<8x128xf32>
    %c2 = arith.constant 2 : index
    %c0_13 = arith.constant 0 : index
    %c0_14 = arith.constant 0 : index
    %17 = vector.load %arg2[%c2, %c0_13, %c0_14] : memref<5x8x8xf32, #tpu.memory_space<vmem>>, vector<1x8x8xf32>
    %18 = vector.shape_cast %17 : vector<1x8x8xf32> to vector<8x8xf32>
    %c0_15 = arith.constant 0 : index
    %c2_16 = arith.constant 2 : index
    %19 = vector.load %arg3[%c0_15, %c2_16] : memref<8x5xf32, #tpu.memory_space<vmem>>, vector<8x1xf32>
    %cst_17 = arith.constant dense<0.000000e+00> : vector<8x128xf32>
    %20 = tpu.matmul %18, %16, %cst_17 {dimension_numbers = #tpu.dot_dimension_numbers<[1], [0], [0], [1], [0, 0, 1, 1], [], []>} : vector<8x8xf32>, vector<8x128xf32>, vector<8x128xf32> -> vector<8x128xf32>
    %21 = vector.broadcast %19 : vector<8x1xf32> to vector<8x128xf32>
    %22 = arith.addf %20, %21 : vector<8x128xf32>
    %cst_18 = arith.constant 0.000000e+00 : f32
    %23 = vector.broadcast %cst_18 : f32 to vector<8x128xf32>
    %24 = arith.maximumf %22, %23 : vector<8x128xf32>
    %25 = arith.addf %24, %6 : vector<8x128xf32>
    %c3 = arith.constant 3 : index
    %c0_19 = arith.constant 0 : index
    %c0_20 = arith.constant 0 : index
    %26 = vector.load %arg2[%c3, %c0_19, %c0_20] : memref<5x8x8xf32, #tpu.memory_space<vmem>>, vector<1x8x8xf32>
    %27 = vector.shape_cast %26 : vector<1x8x8xf32> to vector<8x8xf32>
    %c0_21 = arith.constant 0 : index
    %c3_22 = arith.constant 3 : index
    %28 = vector.load %arg3[%c0_21, %c3_22] : memref<8x5xf32, #tpu.memory_space<vmem>>, vector<8x1xf32>
    %cst_23 = arith.constant dense<0.000000e+00> : vector<8x128xf32>
    %29 = tpu.matmul %27, %25, %cst_23 {dimension_numbers = #tpu.dot_dimension_numbers<[1], [0], [0], [1], [0, 0, 1, 1], [], []>} : vector<8x8xf32>, vector<8x128xf32>, vector<8x128xf32> -> vector<8x128xf32>
    %30 = vector.broadcast %28 : vector<8x1xf32> to vector<8x128xf32>
    %31 = arith.addf %29, %30 : vector<8x128xf32>
    %cst_24 = arith.constant 0.000000e+00 : f32
    %32 = vector.broadcast %cst_24 : f32 to vector<8x128xf32>
    %33 = arith.maximumf %31, %32 : vector<8x128xf32>
    %c4 = arith.constant 4 : index
    %c0_25 = arith.constant 0 : index
    %c0_26 = arith.constant 0 : index
    %34 = vector.load %arg2[%c4, %c0_25, %c0_26] : memref<5x8x8xf32, #tpu.memory_space<vmem>>, vector<1x8x8xf32>
    %35 = vector.shape_cast %34 : vector<1x8x8xf32> to vector<8x8xf32>
    %c0_27 = arith.constant 0 : index
    %c4_28 = arith.constant 4 : index
    %36 = vector.load %arg3[%c0_27, %c4_28] : memref<8x5xf32, #tpu.memory_space<vmem>>, vector<8x1xf32>
    %cst_29 = arith.constant dense<0.000000e+00> : vector<8x128xf32>
    %37 = tpu.matmul %35, %33, %cst_29 {dimension_numbers = #tpu.dot_dimension_numbers<[1], [0], [0], [1], [0, 0, 1, 1], [], []>} : vector<8x8xf32>, vector<8x128xf32>, vector<8x128xf32> -> vector<8x128xf32>
    %38 = vector.broadcast %36 : vector<8x1xf32> to vector<8x128xf32>
    %39 = arith.addf %37, %38 : vector<8x128xf32>
    %c0_30 = arith.constant 0 : index
    %c0_31 = arith.constant 0 : index
    %40 = vector.load %arg4[%c0_30, %c0_31] : memref<8x128xf32, #tpu.memory_space<vmem>>, vector<8x128xf32>
    tpu.vector_store %arg4[%c0_30, %c0_31], %39 {strides = array<i32>} : memref<8x128xf32, #tpu.memory_space<vmem>>, vector<8x128xf32>,
    return
  }
  func.func @transform_0(%arg0: i32) -> (i32, i32) {
    %c0_i32 = arith.constant 0 : i32
    %c0_i32_0 = arith.constant 0 : i32
    return %c0_i32, %arg0 : i32, i32
  }
  func.func @transform_1(%arg0: i32) -> (i32, i32, i32) {
    %c0_i32 = arith.constant 0 : i32
    %c0_i32_0 = arith.constant 0 : i32
    %c0_i32_1 = arith.constant 0 : i32
    %c0_i32_2 = arith.constant 0 : i32
    return %c0_i32, %c0_i32_0, %c0_i32_1 : i32, i32, i32
  }
  func.func @transform_2(%arg0: i32) -> (i32, i32) {
    %c0_i32 = arith.constant 0 : i32
    %c0_i32_0 = arith.constant 0 : i32
    %c0_i32_1 = arith.constant 0 : i32
    return %c0_i32, %c0_i32_0 : i32, i32
  }
  func.func @transform_3(%arg0: i32) -> (i32, i32) {
    %c0_i32 = arith.constant 0 : i32
    %c0_i32_0 = arith.constant 0 : i32
    return %c0_i32, %arg0 : i32, i32
  }
}

</mosaic_0001>

<llo_original>
// kernel: tpu_custom_call.1
$region0: #{tpu_custom_call.1}
  #allocation0 [shape = 'u32[]', space=smem, size = 0x4, offset = 0x4, fixed_abs, tag = 'smem constant byte address 0x4 - core index']
  #allocation1 [shape = 'u32[72,128]{1,0:T(1,128)}', space=vmem, size = 0x9000, scoped, tag = 'internal scratch']
  %s0 = inlined_call_operand.hbm [shape: f32[8,128], index: 0, kind: input, shape index: {}]
  %s1 = inlined_call_operand.hbm [shape: f32[5,8,8], index: 1, kind: input, shape index: {}]
  %s2 = inlined_call_operand.hbm [shape: f32[8,5], index: 2, kind: input, shape index: {}]
  %s3 = inlined_call_operand.hbm [shape: f32[8,128], index: 3, kind: output, shape index: {}]
  %s4 = sld [smem:[#allocation0]]
  $region34: #{tpu_custom_call.1} parent=0
    _
  %s6 = ssub.s32 1, %s4
  %s7 = scalar_select 0, %s6, %s4
  $region1: #{tpu_custom_call.1} parent=0
    #allocation2 [shape = 'u8[4096]{0}', space=vmem, size = 0x1000, scoped, tag = 'input window, operand 0, single buffered']
    #allocation3 [shape = 's32[1]{0}', space=sflag, size = 0x4, scoped, tag = 'scoped memory for tpu_custom_call.1']
    #allocation4 [shape = 's32[1]{0}', space=sflag, size = 0x4, scoped, tag = 'scoped memory for tpu_custom_call.1']
    #allocation5 [shape = 'u8[20480]{0}', space=vmem, size = 0x5000, scoped, tag = 'input window, operand 1, single buffered']
    #allocation6 [shape = 's32[1]{0}', space=sflag, size = 0x4, scoped, tag = 'scoped memory for tpu_custom_call.1']
    #allocation7 [shape = 'u8[4096]{0}', space=vmem, size = 0x1000, scoped, tag = 'input window, operand 2, single buffered']
    #allocation8 [shape = 'u8[4096]{0}', space=vmem, size = 0x1000, scoped, tag = 'output window, operand 0, single buffered']
    %8 = vsyncpa [#allocation3], 0
    %9 = vsyncpa [#allocation6], 0
    %10 = vsyncpa [#allocation4], 0
    // Predicated region
    $region2: #{tpu_custom_call.1} parent=1 // pred_check
      _
    $region3: #{tpu_custom_call.1} parent=1 // pred_check_branch
      %12 = sbr.rel (0) target = $region5
    $region4: #{tpu_custom_call.1} parent=1 // pred_region
      %14 = vsyncadd [#allocation3], 0
      %s16 = sshll.u32 %s0, 4
      %s17 = int_to_ptr.hbm [resolvable:$true] %s16
      %s18 = sshll.u32 [#allocation2], 4
      %s19 = int_to_ptr.vmem [resolvable:$true] %s18
      %21 = dma.hbm_to_vmem [thread:$0]  %s17, 128, %s19, [#allocation3]
    $region5: #{tpu_custom_call.1} parent=1 // pred_fallthru
      _
    // Predicated region
    $region6: #{tpu_custom_call.1} parent=1 // pred_check
      _
    $region7: #{tpu_custom_call.1} parent=1 // pred_check_branch
      %23 = sbr.rel (0) target = $region9
    $region8: #{tpu_custom_call.1} parent=1 // pred_region
      %25 = vsyncadd [#allocation6], 0
      %s26 = sshll.u32 %s1, 4
      %s27 = int_to_ptr.hbm [resolvable:$true] %s26
      %s28 = sshll.u32 [#allocation5], 4
      %s29 = int_to_ptr.vmem [resolvable:$true] %s28
      %34 = dma.hbm_to_vmem [thread:$0]  %s27, 640, %s29, [#allocation6], 128, 128, 8
    $region9: #{tpu_custom_call.1} parent=1 // pred_fallthru
      _
    // Predicated region
    $region10: #{tpu_custom_call.1} parent=1 // pred_check
      _
    $region11: #{tpu_custom_call.1} parent=1 // pred_check_branch
      %36 = sbr.rel (0) target = $region13
    $region12: #{tpu_custom_call.1} parent=1 // pred_region
      %38 = vsyncadd [#allocation6], 0
      %s40 = sshll.u32 %s2, 4
      %s41 = int_to_ptr.hbm [resolvable:$true] %s40
      %s42 = sshll.u32 [#allocation7], 4
      %s43 = int_to_ptr.vmem [resolvable:$true] %s42
      %45 = dma.hbm_to_vmem [thread:$0]  %s41, 128, %s43, [#allocation6]
    $region13: #{tpu_custom_call.1} parent=1 // pred_fallthru
      _
    // Predicated region
    $region14: #{tpu_custom_call.1} parent=1 // pred_check
      _
    $region15: #{tpu_custom_call.1} parent=1 // pred_check_branch
      %47 = sbr.rel (0) target = $region17
    $region16: #{tpu_custom_call.1} parent=1 // pred_region
      %49 = dma.done [#allocation3], 128
    $region17: #{tpu_custom_call.1} parent=1 // pred_fallthru
      _
    // Predicated region
    $region18: #{tpu_custom_call.1} parent=1 // pred_check
      _
    $region19: #{tpu_custom_call.1} parent=1 // pred_check_branch
      %51 = sbr.rel (0) target = $region21
    $region20: #{tpu_custom_call.1} parent=1 // pred_region
      %53 = dma.done [#allocation6], 640
    $region21: #{tpu_custom_call.1} parent=1 // pred_fallthru
      _
    // Predicated region
    $region22: #{tpu_custom_call.1} parent=1 // pred_check
      _
    $region23: #{tpu_custom_call.1} parent=1 // pred_check_branch
      %55 = sbr.rel (0) target = $region25
    $region24: #{tpu_custom_call.1} parent=1 // pred_region
      %57 = dma.done [#allocation6], 128
    $region25: #{tpu_custom_call.1} parent=1 // pred_fallthru
      _
    %v58 = vld [vmem:[#allocation2] sm:$0xff]
    %v59 = vld [vmem:[#allocation5] sm:$0xff]
    %v60 = vld [vmem:[#allocation7] sm:$0xff]
    %62 = vset.pattern.permute.xlu0 0
    %63 = vperm.xlu0 %62, %v60
    %v64 = vpop.permute.xlu0 %63
    %vm66 = vcmask 64512
    %v68 = vsel %vm66, %v59, 0
    %70 = vmatpush.msra.mxu0 0.0
    %71 = vmatpush.msra.mxu0 0.0
    %72 = vmatpush.msra.mxu0 0.0
    %73 = vmatpush.msra.mxu0 0.0
    %74 = vmatpush.msra.mxu0 0.0
    %75 = vmatpush.msra.mxu0 0.0
    %76 = vmatpush.msra.mxu0 0.0
    %77 = vmatpush.msra.mxu0 0.0
    %78 = vmatpush.msra.mxu0 0.0
    %79 = vmatpush.msra.mxu0 0.0
    %80 = vmatpush.msra.mxu0 0.0
    %81 = vmatpush.msra.mxu0 0.0
    %82 = vmatpush.msra.mxu0 0.0
    %83 = vmatpush.msra.mxu0 0.0
    %84 = vmatpush.msra.mxu0 0.0
    %85 = vmatpush.msra.mxu0 %v58
    %86 = vmatmul.f32.gmra.mxu0 %v68
    %v87 = vpop.f32.mrf.mxu0
    %v88 = vadd.f32 %v64, %v87
    %89 = vdwg.mxu0
    %v90 = vmax.f32 %v58, 0.0
    %s91 = scalar_lea.vmem [#allocation5], 8
    %v92 = vld [vmem:[%s91] sm:$0xff]
    %93 = vset.pattern.permute.xlu0 1
    %94 = vperm.xlu0 %93, %v60
    %v95 = vpop.permute.xlu0 %94
    %v98 = vsel %vm66, %v92, 0
    %100 = vmatpush.msra.mxu0 0.0
    %101 = vmatpush.msra.mxu0 0.0
    %102 = vmatpush.msra.mxu0 0.0
    %103 = vmatpush.msra.mxu0 0.0
    %104 = vmatpush.msra.mxu0 0.0
    %105 = vmatpush.msra.mxu0 0.0
    %106 = vmatpush.msra.mxu0 0.0
    %107 = vmatpush.msra.mxu0 0.0
    %108 = vmatpush.msra.mxu0 0.0
    %109 = vmatpush.msra.mxu0 0.0
    %110 = vmatpush.msra.mxu0 0.0
    %111 = vmatpush.msra.mxu0 0.0
    %112 = vmatpush.msra.mxu0 0.0
    %113 = vmatpush.msra.mxu0 0.0
    %114 = vmatpush.msra.mxu0 0.0
    %115 = vmatpush.msra.mxu0 %v90
    %116 = vmatmul.f32.gmra.mxu0 %v98
    %v117 = vpop.f32.mrf.mxu0
    %v118 = vadd.f32 %v95, %v117
    %119 = vdwg.mxu0
    %v120 = vmax.f32 %v118, 0.0
    %s121 = scalar_lea.vmem [#allocation5], 16
    %v122 = vld [vmem:[%s121] sm:$0xff]
    %123 = vset.pattern.permute.xlu0 2
    %124 = vperm.xlu0 %123, %v60
    %v125 = vpop.permute.xlu0 %124
    %v128 = vsel %vm66, %v122, 0
    %130 = vmatpush.msra.mxu0 0.0
    %131 = vmatpush.msra.mxu0 0.0
    %132 = vmatpush.msra.mxu0 0.0
    %133 = vmatpush.msra.mxu0 0.0
    %134 = vmatpush.msra.mxu0 0.0
    %135 = vmatpush.msra.mxu0 0.0
    %136 = vmatpush.msra.mxu0 0.0
    %137 = vmatpush.msra.mxu0 0.0
    %138 = vmatpush.msra.mxu0 0.0
    %139 = vmatpush.msra.mxu0 0.0
    %140 = vmatpush.msra.mxu0 0.0
    %141 = vmatpush.msra.mxu0 0.0
    %142 = vmatpush.msra.mxu0 0.0
    %143 = vmatpush.msra.mxu0 0.0
    %144 = vmatpush.msra.mxu0 0.0
    %145 = vmatpush.msra.mxu0 %v120
    %146 = vmatmul.f32.gmra.mxu0 %v128
    %v147 = vpop.f32.mrf.mxu0
    %v148 = vadd.f32 %v125, %v147
    %149 = vdwg.mxu0
    %v150 = vmax.f32 %v148, 0.0
    %v151 = vadd.f32 %v150, %v88
    %s152 = scalar_lea.vmem [#allocation5], 24
    %v153 = vld [vmem:[%s152] sm:$0xff]
    %154 = vset.pattern.permute.xlu0 3
    %155 = vperm.xlu0 %154, %v60
    %v156 = vpop.permute.xlu0 %155
    %v159 = vsel %vm66, %v153, 0
    %161 = vmatpush.msra.mxu0 0.0
    %162 = vmatpush.msra.mxu0 0.0
    %163 = vmatpush.msra.mxu0 0.0
    %164 = vmatpush.msra.mxu0 0.0
    %165 = vmatpush.msra.mxu0 0.0
    %166 = vmatpush.msra.mxu0 0.0
    %167 = vmatpush.msra.mxu0 0.0
    %168 = vmatpush.msra.mxu0 0.0
    %169 = vmatpush.msra.mxu0 0.0
    %170 = vmatpush.msra.mxu0 0.0
    %171 = vmatpush.msra.mxu0 0.0
    %172 = vmatpush.msra.mxu0 0.0
    %173 = vmatpush.msra.mxu0 0.0
    %174 = vmatpush.msra.mxu0 0.0
    %175 = vmatpush.msra.mxu0 0.0
    %176 = vmatpush.msra.mxu0 %v151
    %177 = vmatmul.f32.gmra.mxu0 %v159
    %v178 = vpop.f32.mrf.mxu0
    %v179 = vadd.f32 %v156, %v178
    %180 = vdwg.mxu0
    %v181 = vmax.f32 %v179, 0.0
    %s182 = scalar_lea.vmem [#allocation5], 32
    %v183 = vld [vmem:[%s182] sm:$0xff]
    %184 = vset.pattern.permute.xlu0 4
    %185 = vperm.xlu0 %184, %v60
    %v186 = vpop.permute.xlu0 %185
    %v189 = vsel %vm66, %v183, 0
    %191 = vmatpush.msra.mxu0 0.0
    %192 = vmatpush.msra.mxu0 0.0
    %193 = vmatpush.msra.mxu0 0.0
    %194 = vmatpush.msra.mxu0 0.0
    %195 = vmatpush.msra.mxu0 0.0
    %196 = vmatpush.msra.mxu0 0.0
    %197 = vmatpush.msra.mxu0 0.0
    %198 = vmatpush.msra.mxu0 0.0
    %199 = vmatpush.msra.mxu0 0.0
    %200 = vmatpush.msra.mxu0 0.0
    %201 = vmatpush.msra.mxu0 0.0
    %202 = vmatpush.msra.mxu0 0.0
    %203 = vmatpush.msra.mxu0 0.0
    %204 = vmatpush.msra.mxu0 0.0
    %205 = vmatpush.msra.mxu0 0.0
    %206 = vmatpush.msra.mxu0 %v181
    %207 = vmatmul.f32.gmra.mxu0 %v189
    %v208 = vpop.f32.mrf.mxu0
    %v209 = vadd.f32 %v186, %v208
    %210 = vdwg.mxu0
    %211 = vst [vmem:[#allocation8] sm:$0xff] %v209
    // Predicated region
    $region26: #{tpu_custom_call.1} parent=1 // pred_check
      _
    $region27: #{tpu_custom_call.1} parent=1 // pred_check_branch
      %213 = sbr.rel (0) target = $region29
    $region28: #{tpu_custom_call.1} parent=1 // pred_region
      %215 = vsyncadd [#allocation4], 0
      %s217 = sshll.u32 [#allocation8], 4
      %s218 = int_to_ptr.vmem [resolvable:$true] %s217
      %s219 = sshll.u32 %s3, 4
      %s220 = int_to_ptr.hbm [resolvable:$true] %s219
      %222 = dma.vmem_to_hbm [thread:$0]  %s218, 128, %s220, [#allocation4]
    $region29: #{tpu_custom_call.1} parent=1 // pred_fallthru
      _
    // Predicated region
    $region30: #{tpu_custom_call.1} parent=1 // pred_check
      _
    $region31: #{tpu_custom_call.1} parent=1 // pred_check_branch
      %224 = sbr.rel (0) target = $region33
    $region32: #{tpu_custom_call.1} parent=1 // pred_region
      %226 = dma.done [#allocation4], 128
    $region33: #{tpu_custom_call.1} parent=1 // pred_fallthru
      _
    %227 = vsyncpa [#allocation3], 1
    %228 = vsyncpa [#allocation6], 1
    %229 = vsyncpa [#allocation4], 1

</llo_original>
